<compile_context>
chip_gen: v7x
topology: tpu7x:2x2x1
jax: 0.10.0
libtpu: 0.0.40
codegen_flags: <defaults>
</compile_context>

<pallas_src>
import math

import jax
import jax.numpy as jnp
from jax.experimental import pallas as pl
from jax.experimental.pallas import tpu as pltpu

WORD_EMB = 768  # self.word_emb in the PyTorch module


def _round_up(x, m):
    return ((x + m - 1) // m) * m


def _pick_tb(B):
    """Batch tile size.

    - Small batches: one block equal to the full batch dim (escape hatch of the
      (8,128) rule, no padding, no partial block).
    - Larger batches: target ~512 rows/tile (mem-bound sweet spot) but keep at
      least 2 grid steps so the 'parallel' batch axis shards across the two
      TensorCores on v7x.
    """
    if B <= 16:
        return B
    half = _round_up((B + 1) // 2, 16)
    return max(16, min(512, half))


# ----------------------------------------------------------------------------
# Pallas kernel: Linear(768 -> item_dim) + exact (erf) GELU on CLS rows
# ----------------------------------------------------------------------------
def mae_encoder_kernel(cls_ref, w_ref, b_ref, o_ref):
    # cls_ref: (tb, 768)  CLS rows for this batch tile (selected by BlockSpec)
    # w_ref:   (768, Dp)  cv_proj weight, [in, out] layout for the MXU (bf16)
    # b_ref:   (1, Dp)    cv_proj bias (f32)
    # o_ref:   (tb, Dp)   output
    x = cls_ref[...].astype(w_ref.dtype)          # in-VMEM cast; no extra HBM pass
    y = jnp.dot(x, w_ref[...], preferred_element_type=jnp.float32)
    y = y + b_ref[...]
    # nn.GELU() default in PyTorch is the exact erf formulation; keep f32 math
    # (v5e has no bf16 VPU/EUP).
    inv_sqrt2 = 0.7071067811865475
    o_ref[...] = (0.5 * y * (1.0 + jax.lax.erf(y * inv_sqrt2))).astype(o_ref.dtype)


# ----------------------------------------------------------------------------
# One-time cv_proj parameter prep (hoisted out of the per-call path)
# ----------------------------------------------------------------------------
def prepare_cv_proj_params(weight, bias, *, compute_dtype=jnp.bfloat16):
    """weight: PyTorch Linear layout (item_dim, 768); bias: (item_dim,).

    Returns (weight_t, bias_row, item_dim) where weight_t is (768, Dp) in MXU
    [in, out] layout (bf16 by default) and bias_row is (1, Dp) f32, with
    Dp = item_dim rounded up to a multiple of 128 so output stores are
    lane-dense unmasked vst.
    """
    D, E = weight.shape
    assert E == WORD_EMB
    Dp = _round_up(D, 128)
    w_t = jnp.asarray(weight).T                                # (768, D)
    b = jnp.asarray(bias, jnp.float32)
    if Dp != D:
        w_t = jnp.pad(w_t, ((0, 0), (0, Dp - D)))
        b = jnp.pad(b, (0, Dp - D))
    if compute_dtype is not None:
        w_t = w_t.astype(compute_dtype)
    return w_t, b.reshape(1, Dp), D


# ----------------------------------------------------------------------------
# Wrapper: CLS select + Linear + GELU, all inside one pallas_call
# ----------------------------------------------------------------------------
def mae_encoder_proj(hidden, weight_t, bias_row, item_dim, *,
                     out_dtype=jnp.float32, tb=None):
    """hidden: (B, S, 768) backbone output; weight_t: (768, Dp); bias_row: (1, Dp).

    Returns (B, item_dim).  CLS selection is done by the input BlockSpec on a
    flattened (B, S*768) view, so only the CLS rows are DMA'd.
    """
    B, S, E = hidden.shape
    Dp = weight_t.shape[1]

    # Row-major metadata-only reshape: CLS row of example b == columns [0, E)
    # of row b.  The BlockSpec below picks column-block 0 -> only CLS rows move.
    hidden_flat = hidden.reshape(B, S * E)

    if tb is None:
        tb = _pick_tb(B)
    grid = (pl.cdiv(B, tb),)   # partial final block: OOB rows clipped on store

    out = pl.pallas_call(
        mae_encoder_kernel,
        out_shape=jax.ShapeDtypeStruct((B, Dp), out_dtype),
        grid=grid,
        in_specs=[
            # CLS rows only: batch-tiled, column-block 0 of the flattened view.
            pl.BlockSpec((tb, E), lambda i: (i, 0)),
            # Weight & bias: constant index_map -> DMA'd once, resident.
            pl.BlockSpec((E, Dp), lambda i: (0, 0)),
            pl.BlockSpec((1, Dp), lambda i: (0, 0)),
        ],
        out_specs=pl.BlockSpec((tb, Dp), lambda i: (i, 0)),
        compiler_params=pltpu.CompilerParams(
            dimension_semantics=("parallel",)),
        cost_estimate=pl.CostEstimate(
            flops=2 * B * E * Dp,
            transcendentals=B * Dp,
            bytes_accessed=(B * E * hidden.dtype.itemsize        # CLS rows
                            + E * Dp * weight_t.dtype.itemsize   # weight
                            + Dp * 4                             # bias
                            + B * Dp * jnp.dtype(out_dtype).itemsize),
        ),
    )(hidden_flat, weight_t, bias_row)

    return out[:, :item_dim] if Dp != item_dim else out


# ----------------------------------------------------------------------------
# Deterministic stand-in for the external `image_net` backbone (plain JAX glue)
# ----------------------------------------------------------------------------
def make_image_net_params(key, in_ch=3, patch=16, embed=WORD_EMB):
    k1, k2 = jax.random.split(key)
    w_patch = jax.random.normal(k1, (in_ch * patch * patch, embed), jnp.float32) * 0.02
    cls_tok = jax.random.normal(k2, (1, 1, embed), jnp.float32) * 0.02
    return w_patch, cls_tok


def image_net_stub(item_content, params, patch=16):
    # item_content: NCHW images (PyTorch conv input convention).
    w_patch, cls_tok = params
    B, C, H, W = item_content.shape
    x = item_content.reshape(B, C, H // patch, patch, W // patch, patch)
    x = x.transpose(0, 2, 4, 1, 3, 5).reshape(
        B, (H // patch) * (W // patch), C * patch * patch
    )
    tokens = x @ w_patch                                    # (B, num_patches, 768)
    # Make the CLS row depend on the image content so the test is non-trivial.
    cls = cls_tok + tokens.mean(axis=1, keepdims=True)      # (B, 1, 768)
    hidden = jnp.concatenate([cls, tokens], axis=1)         # (B, 1+num_patches, 768)
    return (hidden,)                                        # mimic tuple return


# ----------------------------------------------------------------------------
if __name__ == "__main__":
    key = jax.random.PRNGKey(0)
    k_img, k_net, k_w = jax.random.split(key, 3)

    B = 2
    item_dim = 128

    # NCHW input images
    item_content = jax.random.normal(k_img, (B, 3, 32, 32), jnp.float32)

    # cv_proj parameters: PyTorch Linear(768, item_dim) weight is (item_dim, 768),
    # xavier_normal_ init -> std = sqrt(2 / (fan_in + fan_out)); bias = 0.
    std = math.sqrt(2.0 / (WORD_EMB + item_dim))
    w = jax.random.normal(k_w, (item_dim, WORD_EMB), jnp.float32) * std
    b = jnp.zeros((item_dim,), jnp.float32)

    # image_net(item_content)[0]
    net_params = make_image_net_params(k_net)
    hidden = image_net_stub(item_content, net_params)[0]     # (B, 5, 768)

    # One-time weight prep (transpose, lane pad, bf16 cast) -- not per call.
    w_t, bias_row, D = prepare_cv_proj_params(w, b)

    # Pallas kernel: [:, 0] -> cv_proj -> GELU (bf16 MXU operands, f32 acc)
    out = mae_encoder_proj(hidden, w_t, bias_row, D)
    out = jax.block_until_ready(out)
    assert out.shape == (B, item_dim)

    # Reference: same bf16-rounded operands, f32 math, exact (erf) GELU.
    cls_bf = hidden[:, 0].astype(jnp.bfloat16).astype(jnp.float32)
    w_bf = w.T.astype(jnp.bfloat16).astype(jnp.float32)
    ref = jax.nn.gelu(cls_bf @ w_bf + b, approximate=False)
    assert jnp.allclose(out, ref, atol=1e-4, rtol=1e-4), float(
        jnp.max(jnp.abs(out - ref))
    )

    # Loose sanity check against the full-f32 reference as well.
    ref_f32 = jax.nn.gelu(hidden[:, 0] @ w.T + b, approximate=False)
    assert jnp.allclose(out, ref_f32, atol=2e-2, rtol=2e-2)

    print("KERNEL_OK")
</pallas_src>

<mosaic_0001>
module attributes {stable_mosaic.version = 11 : i64} {
  func.func @mae_encoder_kernel(%arg0: i32, %arg1: memref<2x768xf32, #tpu.memory_space<vmem>>, %arg2: memref<768x128xbf16, #tpu.memory_space<vmem>>, %arg3: memref<1x128xf32, #tpu.memory_space<vmem>>, %arg4: memref<2x128xf32, #tpu.memory_space<vmem>>) attributes {dimension_semantics = [#tpu.dimension_semantics<parallel>], iteration_bounds = array<i64: 1>, scalar_prefetch = 0 : i64, scratch_operands = 0 : i64, tpu.core_type = #tpu.core_type<tc>, window_params = [{transform_indices = @transform_0, window_bounds = array<i64: 2, 768>}, {pipeline_mode = #tpu.pipeline_mode<synchronous>, transform_indices = @transform_1, window_bounds = array<i64: 768, 128>}, {pipeline_mode = #tpu.pipeline_mode<synchronous>, transform_indices = @transform_2, window_bounds = array<i64: 1, 128>}, {transform_indices = @transform_3, window_bounds = array<i64: 2, 128>}]} {
    %c0 = arith.constant 0 : index
    %c0_0 = arith.constant 0 : index
    %0 = vector.load %arg1[%c0, %c0_0] : memref<2x768xf32, #tpu.memory_space<vmem>>, vector<2x768xf32>
    %1 = arith.truncf %0 : vector<2x768xf32> to vector<2x768xbf16>
    %c0_1 = arith.constant 0 : index
    %c0_2 = arith.constant 0 : index
    %2 = vector.load %arg2[%c0_1, %c0_2] : memref<768x128xbf16, #tpu.memory_space<vmem>>, vector<768x128xbf16>
    %cst = arith.constant dense<0.000000e+00> : vector<2x128xf32>
    %3 = tpu.matmul %1, %2, %cst {dimension_numbers = #tpu.dot_dimension_numbers<[1], [0], [0], [1], [0, 0, 1, 1], [], []>} : vector<2x768xbf16>, vector<768x128xbf16>, vector<2x128xf32> -> vector<2x128xf32>
    %c0_3 = arith.constant 0 : index
    %c0_4 = arith.constant 0 : index
    %4 = vector.load %arg3[%c0_3, %c0_4] : memref<1x128xf32, #tpu.memory_space<vmem>>, vector<1x128xf32>
    %5 = vector.broadcast %4 : vector<1x128xf32> to vector<2x128xf32>
    %6 = arith.addf %3, %5 : vector<2x128xf32>
    %cst_5 = arith.constant 5.000000e-01 : f32
    %7 = vector.broadcast %cst_5 : f32 to vector<2x128xf32>
    %8 = arith.mulf %7, %6 : vector<2x128xf32>
    %cst_6 = arith.constant 0.707106769 : f32
    %9 = vector.broadcast %cst_6 : f32 to vector<2x128xf32>
    %10 = arith.mulf %6, %9 : vector<2x128xf32>
    %11 = math.erf %10 : vector<2x128xf32>
    %cst_7 = arith.constant 1.000000e+00 : f32
    %12 = vector.broadcast %cst_7 : f32 to vector<2x128xf32>
    %13 = arith.addf %12, %11 : vector<2x128xf32>
    %14 = arith.mulf %8, %13 : vector<2x128xf32>
    %c0_8 = arith.constant 0 : index
    %c0_9 = arith.constant 0 : index
    %15 = vector.load %arg4[%c0_8, %c0_9] : memref<2x128xf32, #tpu.memory_space<vmem>>, vector<2x128xf32>
    tpu.vector_store %arg4[%c0_8, %c0_9], %14 {strides = array<i32>} : memref<2x128xf32, #tpu.memory_space<vmem>>, vector<2x128xf32>,
    return
  }
  func.func @transform_0(%arg0: i32) -> (i32, i32) {
    %c0_i32 = arith.constant 0 : i32
    %c0_i32_0 = arith.constant 0 : i32
    return %arg0, %c0_i32 : i32, i32
  }
  func.func @transform_1(%arg0: i32) -> (i32, i32) {
    %c0_i32 = arith.constant 0 : i32
    %c0_i32_0 = arith.constant 0 : i32
    %c0_i32_1 = arith.constant 0 : i32
    return %c0_i32, %c0_i32_0 : i32, i32
  }
  func.func @transform_2(%arg0: i32) -> (i32, i32) {
    %c0_i32 = arith.constant 0 : i32
    %c0_i32_0 = arith.constant 0 : i32
    %c0_i32_1 = arith.constant 0 : i32
    return %c0_i32, %c0_i32_0 : i32, i32
  }
  func.func @transform_3(%arg0: i32) -> (i32, i32) {
    %c0_i32 = arith.constant 0 : i32
    %c0_i32_0 = arith.constant 0 : i32
    return %arg0, %c0_i32 : i32, i32
  }
}

</mosaic_0001>

<llo_original>
// kernel: tpu_custom_call.1
$region0: #{tpu_custom_call.1}
  #allocation0 [shape = 'u32[]', space=smem, size = 0x4, offset = 0x4, fixed_abs, tag = 'smem constant byte address 0x4 - core index']
  #allocation1 [shape = 'u32[144,128]{1,0:T(1,128)}', space=vmem, size = 0x12000, scoped, tag = 'internal scratch']
  %s0 = inlined_call_operand.hbm [shape: f32[2,3840], index: 0, kind: input, shape index: {}]
  %s1 = inlined_call_operand.hbm [shape: bf16[768,128], index: 1, kind: input, shape index: {}]
  %s2 = inlined_call_operand.vmem [shape: f32[1,128], index: 2, kind: input, shape index: {}]
  %s3 = inlined_call_operand.hbm [shape: f32[2,128], index: 3, kind: output, shape index: {}]
  %s4 = sld [smem:[#allocation0]]
  $region30: #{tpu_custom_call.1} parent=0
    _
  %s6 = ssub.s32 1, %s4
  %s7 = scalar_select 0, %s6, %s4
  $region1: #{tpu_custom_call.1} parent=0
    #allocation2 [shape = 'u8[6144]{0}', space=vmem, size = 0x1800, scoped, tag = 'input window, operand 0, single buffered']
    #allocation3 [shape = 's32[1]{0}', space=sflag, size = 0x4, scoped, tag = 'scoped memory for tpu_custom_call.1']
    #allocation4 [shape = 's32[1]{0}', space=sflag, size = 0x4, scoped, tag = 'scoped memory for tpu_custom_call.1']
    #allocation5 [shape = 'u8[196608]{0}', space=vmem, size = 0x30000, scoped, tag = 'input window, operand 1, single buffered']
    #allocation6 [shape = 's32[1]{0}', space=sflag, size = 0x4, scoped, tag = 'scoped memory for tpu_custom_call.1']
    #allocation7 [shape = 'u8[1024]{0}', space=vmem, size = 0x400, scoped, tag = 'output window, operand 0, single buffered']
    %8 = vsyncpa [#allocation3], 0
    %9 = vsyncpa [#allocation6], 0
    %10 = vsyncpa [#allocation4], 0
    // Predicated region
    $region2: #{tpu_custom_call.1} parent=1 // pred_check
      _
    $region3: #{tpu_custom_call.1} parent=1 // pred_check_branch
      %12 = sbr.rel (0) target = $region5
    $region4: #{tpu_custom_call.1} parent=1 // pred_region
      %s14 = ssub.s32 192, 192
      %15 = vsyncadd [#allocation3], %s14
      %s17 = sshll.u32 [#allocation2], 4
      %s18 = int_to_ptr.vmem [resolvable:$true] %s17
      %20 = dma.hbm_to_vmem [thread:$0]  %s0, 192, %s18, [#allocation3]
    $region5: #{tpu_custom_call.1} parent=1 // pred_fallthru
      _
    // Predicated region
    $region6: #{tpu_custom_call.1} parent=1 // pred_check
      _
    $region7: #{tpu_custom_call.1} parent=1 // pred_check_branch
      %22 = sbr.rel (0) target = $region9
    $region8: #{tpu_custom_call.1} parent=1 // pred_region
      %s24 = ssub.s32 6144, 6144
      %25 = vsyncadd [#allocation6], %s24
      %s26 = sshll.u32 [#allocation5], 4
      %s27 = int_to_ptr.vmem [resolvable:$true] %s26
      %32 = dma.hbm_to_vmem [thread:$0]  %s1, 6144, %s27, [#allocation6], 64, 64, 4
    $region9: #{tpu_custom_call.1} parent=1 // pred_fallthru
      _
    // Predicated region
    $region10: #{tpu_custom_call.1} parent=1 // pred_check
      _
    $region11: #{tpu_custom_call.1} parent=1 // pred_check_branch
      %34 = sbr.rel (0) target = $region13
    $region12: #{tpu_custom_call.1} parent=1 // pred_region
      _
    $region13: #{tpu_custom_call.1} parent=1 // pred_fallthru
      _
    // Predicated region
    $region14: #{tpu_custom_call.1} parent=1 // pred_check
      _
    $region15: #{tpu_custom_call.1} parent=1 // pred_check_branch
      %36 = sbr.rel (0) target = $region17
    $region16: #{tpu_custom_call.1} parent=1 // pred_region
      %37 = dma.done [#allocation3], 192
    $region17: #{tpu_custom_call.1} parent=1 // pred_fallthru
      _
    // Predicated region
    $region18: #{tpu_custom_call.1} parent=1 // pred_check
      _
    $region19: #{tpu_custom_call.1} parent=1 // pred_check_branch
      %39 = sbr.rel (0) target = $region21
    $region20: #{tpu_custom_call.1} parent=1 // pred_region
      %40 = dma.done [#allocation6], 6144
    $region21: #{tpu_custom_call.1} parent=1 // pred_fallthru
      _
    %v42 = vld [vmem:[#allocation2] sm:$0xff]
    %v43 = vld [vmem:[#allocation2 + $0x8] sm:$0xf]
    %v46 = vcombine.high %v42, %v42
    %v48 = vunpack.c.l.s4 1983009808
    %v49 = vunpack.c.0.s8 %v48
    %v50 = vlaneseq
    %v51 = vshrl.u32 %v50, 7
    %v52 = vsub.s32 %v49, %v51
    %v53 = vrot.slane %v42, %v52
    %v55 = vunpack.c.l.s4 1983009808
    %v56 = vunpack.c.0.s8 %v55
    %v57 = vlaneseq
    %v58 = vshrl.u32 %v57, 7
    %v59 = vsub.s32 %v56, %v58
    %v60 = vrot.slane %v46, %v59
    %v61 = vcombine.high %v53, %v53
    %v62 = vcombine.high %v60, %v60
    %v64 = vunpack.c.l.s4 1983009808
    %v65 = vunpack.c.0.s8 %v64
    %v66 = vlaneseq
    %v67 = vshrl.u32 %v66, 7
    %v68 = vsub.s32 %v65, %v67
    %v69 = vrot.slane %v43, %v68
    %v70 = vcombine.high %v69, %v69
    %v77 = vpack.c.bf16 %v53, %v53
    %v78 = vpack.c.bf16 %v61, %v61
    %v79 = vpack.c.bf16 %v60, %v60
    %v80 = vpack.c.bf16 %v62, %v62
    %v81 = vpack.c.bf16 %v69, %v69
    %v82 = vpack.c.bf16 %v70, %v70
    %v83 = vld [vmem:[#allocation5] sm:$0xf]
    %v84 = vld [vmem:[#allocation5 + $0x4] sm:$0xf]
    %v85 = vld [vmem:[#allocation5 + $0x8] sm:$0xf]
    %v86 = vld [vmem:[#allocation5 + $0xc] sm:$0xf]
    %v87 = vld [vmem:[#allocation5 + $0x10] sm:$0xf]
    %v88 = vld [vmem:[#allocation5 + $0x14] sm:$0xf]
    %v89 = vld [vmem:[#allocation5 + $0x18] sm:$0xf]
    %v90 = vld [vmem:[#allocation5 + $0x1c] sm:$0xf]
    %v91 = vld [vmem:[#allocation5 + $0x20] sm:$0xf]
    %v92 = vld [vmem:[#allocation5 + $0x24] sm:$0xf]
    %v93 = vld [vmem:[#allocation5 + $0x28] sm:$0xf]
    %v94 = vld [vmem:[#allocation5 + $0x2c] sm:$0xf]
    %v95 = vld [vmem:[#allocation5 + $0x30] sm:$0xf]
    %v96 = vld [vmem:[#allocation5 + $0x34] sm:$0xf]
    %v97 = vld [vmem:[#allocation5 + $0x38] sm:$0xf]
    %v98 = vld [vmem:[#allocation5 + $0x3c] sm:$0xf]
    %v99 = vld [vmem:[#allocation5 + $0x40] sm:$0xf]
    %v100 = vld [vmem:[#allocation5 + $0x44] sm:$0xf]
    %v101 = vld [vmem:[#allocation5 + $0x48] sm:$0xf]
    %v102 = vld [vmem:[#allocation5 + $0x4c] sm:$0xf]
    %v103 = vld [vmem:[#allocation5 + $0x50] sm:$0xf]
    %v104 = vld [vmem:[#allocation5 + $0x54] sm:$0xf]
    %v105 = vld [vmem:[#allocation5 + $0x58] sm:$0xf]
    %v106 = vld [vmem:[#allocation5 + $0x5c] sm:$0xf]
    %v107 = vld [vmem:[#allocation5 + $0x60] sm:$0xf]
    %v108 = vld [vmem:[#allocation5 + $0x64] sm:$0xf]
    %v109 = vld [vmem:[#allocation5 + $0x68] sm:$0xf]
    %v110 = vld [vmem:[#allocation5 + $0x6c] sm:$0xf]
    %v111 = vld [vmem:[#allocation5 + $0x70] sm:$0xf]
    %v112 = vld [vmem:[#allocation5 + $0x74] sm:$0xf]
    %v113 = vld [vmem:[#allocation5 + $0x78] sm:$0xf]
    %v114 = vld [vmem:[#allocation5 + $0x7c] sm:$0xf]
    %v115 = vld [vmem:[#allocation5 + $0x80] sm:$0xf]
    %v116 = vld [vmem:[#allocation5 + $0x84] sm:$0xf]
    %v117 = vld [vmem:[#allocation5 + $0x88] sm:$0xf]
    %v118 = vld [vmem:[#allocation5 + $0x8c] sm:$0xf]
    %v119 = vld [vmem:[#allocation5 + $0x90] sm:$0xf]
    %v120 = vld [vmem:[#allocation5 + $0x94] sm:$0xf]
    %v121 = vld [vmem:[#allocation5 + $0x98] sm:$0xf]
    %v122 = vld [vmem:[#allocation5 + $0x9c] sm:$0xf]
    %v123 = vld [vmem:[#allocation5 + $0xa0] sm:$0xf]
    %v124 = vld [vmem:[#allocation5 + $0xa4] sm:$0xf]
    %v125 = vld [vmem:[#allocation5 + $0xa8] sm:$0xf]
    %v126 = vld [vmem:[#allocation5 + $0xac] sm:$0xf]
    %v127 = vld [vmem:[#allocation5 + $0xb0] sm:$0xf]
    %v128 = vld [vmem:[#allocation5 + $0xb4] sm:$0xf]
    %v129 = vld [vmem:[#allocation5 + $0xb8] sm:$0xf]
    %v130 = vld [vmem:[#allocation5 + $0xbc] sm:$0xf]
    %v131 = vld [vmem:[#allocation5 + $0xc0] sm:$0xf]
    %v132 = vld [vmem:[#allocation5 + $0xc4] sm:$0xf]
    %v133 = vld [vmem:[#allocation5 + $0xc8] sm:$0xf]
    %v134 = vld [vmem:[#allocation5 + $0xcc] sm:$0xf]
    %v135 = vld [vmem:[#allocation5 + $0xd0] sm:$0xf]
    %v136 = vld [vmem:[#allocation5 + $0xd4] sm:$0xf]
    %v137 = vld [vmem:[#allocation5 + $0xd8] sm:$0xf]
    %v138 = vld [vmem:[#allocation5 + $0xdc] sm:$0xf]
    %v139 = vld [vmem:[#allocation5 + $0xe0] sm:$0xf]
    %v140 = vld [vmem:[#allocation5 + $0xe4] sm:$0xf]
    %v141 = vld [vmem:[#allocation5 + $0xe8] sm:$0xf]
    %v142 = vld [vmem:[#allocation5 + $0xec] sm:$0xf]
    %v143 = vld [vmem:[#allocation5 + $0xf0] sm:$0xf]
    %v144 = vld [vmem:[#allocation5 + $0xf4] sm:$0xf]
    %v145 = vld [vmem:[#allocation5 + $0xf8] sm:$0xf]
    %v146 = vld [vmem:[#allocation5 + $0xfc] sm:$0xf]
    %v147 = vld [vmem:[#allocation5 + $0x100] sm:$0xf]
    %v148 = vld [vmem:[#allocation5 + $0x104] sm:$0xf]
    %v149 = vld [vmem:[#allocation5 + $0x108] sm:$0xf]
    %v150 = vld [vmem:[#allocation5 + $0x10c] sm:$0xf]
    %v151 = vld [vmem:[#allocation5 + $0x110] sm:$0xf]
    %v152 = vld [vmem:[#allocation5 + $0x114] sm:$0xf]
    %v153 = vld [vmem:[#allocation5 + $0x118] sm:$0xf]
    %v154 = vld [vmem:[#allocation5 + $0x11c] sm:$0xf]
    %v155 = vld [vmem:[#allocation5 + $0x120] sm:$0xf]
    %v156 = vld [vmem:[#allocation5 + $0x124] sm:$0xf]
    %v157 = vld [vmem:[#allocation5 + $0x128] sm:$0xf]
    %v158 = vld [vmem:[#allocation5 + $0x12c] sm:$0xf]
    %v159 = vld [vmem:[#allocation5 + $0x130] sm:$0xf]
    %v160 = vld [vmem:[#allocation5 + $0x134] sm:$0xf]
    %v161 = vld [vmem:[#allocation5 + $0x138] sm:$0xf]
    %v162 = vld [vmem:[#allocation5 + $0x13c] sm:$0xf]
    %v163 = vld [vmem:[#allocation5 + $0x140] sm:$0xf]
    %v164 = vld [vmem:[#allocation5 + $0x144] sm:$0xf]
    %v165 = vld [vmem:[#allocation5 + $0x148] sm:$0xf]
    %v166 = vld [vmem:[#allocation5 + $0x14c] sm:$0xf]
    %v167 = vld [vmem:[#allocation5 + $0x150] sm:$0xf]
    %v168 = vld [vmem:[#allocation5 + $0x154] sm:$0xf]
    %v169 = vld [vmem:[#allocation5 + $0x158] sm:$0xf]
    %v170 = vld [vmem:[#allocation5 + $0x15c] sm:$0xf]
    %v171 = vld [vmem:[#allocation5 + $0x160] sm:$0xf]
    %v172 = vld [vmem:[#allocation5 + $0x164] sm:$0xf]
    %v173 = vld [vmem:[#allocation5 + $0x168] sm:$0xf]
    %v174 = vld [vmem:[#allocation5 + $0x16c] sm:$0xf]
    %v175 = vld [vmem:[#allocation5 + $0x170] sm:$0xf]
    %v176 = vld [vmem:[#allocation5 + $0x174] sm:$0xf]
    %v177 = vld [vmem:[#allocation5 + $0x178] sm:$0xf]
    %v178 = vld [vmem:[#allocation5 + $0x17c] sm:$0xf]
    %v179 = vld [vmem:[%s2] sm:$0x1]
    %v181 = vlaneseq
    %v182 = vshrl.u32 %v181, 7
    %v183 = vsub.s32 0, %v182
    %v184 = vrot.slane %v179, %v183
    %v282 = vunpack.c.l.b16 %v83
    %v283 = vunpack.c.l.b16 %v84
    %v284 = vunpack.c.l.b16 %v85
    %v285 = vunpack.c.l.b16 %v86
    %v286 = vunpack.c.l.b16 %v87
    %v287 = vunpack.c.l.b16 %v88
    %v288 = vunpack.c.l.b16 %v89
    %v289 = vunpack.c.l.b16 %v90
    %v290 = vunpack.c.l.b16 %v91
    %v291 = vunpack.c.l.b16 %v92
    %v292 = vunpack.c.l.b16 %v93
    %v293 = vunpack.c.l.b16 %v94
    %v294 = vunpack.c.l.b16 %v95
    %v295 = vunpack.c.l.b16 %v96
    %v296 = vunpack.c.l.b16 %v97
    %v297 = vunpack.c.l.b16 %v98
    %v298 = vunpack.c.l.b16 %v99
    %v299 = vunpack.c.l.b16 %v100
    %v300 = vunpack.c.l.b16 %v101
    %v301 = vunpack.c.l.b16 %v102
    %v302 = vunpack.c.l.b16 %v103
    %v303 = vunpack.c.l.b16 %v104
    %v304 = vunpack.c.l.b16 %v105
    %v305 = vunpack.c.l.b16 %v106
    %v306 = vunpack.c.l.b16 %v107
    %v307 = vunpack.c.l.b16 %v108
    %v308 = vunpack.c.l.b16 %v109
    %v309 = vunpack.c.l.b16 %v110
    %v310 = vunpack.c.l.b16 %v111
    %v311 = vunpack.c.l.b16 %v112
    %v312 = vunpack.c.l.b16 %v113
    %v313 = vunpack.c.l.b16 %v114
    %v314 = vunpack.c.l.b16 %v115
    %v315 = vunpack.c.l.b16 %v116
    %v316 = vunpack.c.l.b16 %v117
    %v317 = vunpack.c.l.b16 %v118
    %v318 = vunpack.c.l.b16 %v119
    %v319 = vunpack.c.l.b16 %v120
    %v320 = vunpack.c.l.b16 %v121
    %v321 = vunpack.c.l.b16 %v122
    %v322 = vunpack.c.l.b16 %v123
    %v323 = vunpack.c.l.b16 %v124
    %v324 = vunpack.c.l.b16 %v125
    %v325 = vunpack.c.l.b16 %v126
    %v326 = vunpack.c.l.b16 %v127
    %v327 = vunpack.c.l.b16 %v128
    %v328 = vunpack.c.l.b16 %v129
    %v329 = vunpack.c.l.b16 %v130
    %v330 = vunpack.c.l.b16 %v131
    %v331 = vunpack.c.l.b16 %v132
    %v332 = vunpack.c.l.b16 %v133
    %v333 = vunpack.c.l.b16 %v134
    %v334 = vunpack.c.l.b16 %v135
    %v335 = vunpack.c.l.b16 %v136
    %v336 = vunpack.c.l.b16 %v137
    %v337 = vunpack.c.l.b16 %v138
    %v338 = vunpack.c.l.b16 %v139
    %v339 = vunpack.c.l.b16 %v140
    %v340 = vunpack.c.l.b16 %v141
    %v341 = vunpack.c.l.b16 %v142
    %v342 = vunpack.c.l.b16 %v143
    %v343 = vunpack.c.l.b16 %v144
    %v344 = vunpack.c.l.b16 %v145
    %v345 = vunpack.c.l.b16 %v146
    %v346 = vunpack.c.l.b16 %v147
    %v347 = vunpack.c.l.b16 %v148
    %v348 = vunpack.c.l.b16 %v149
    %v349 = vunpack.c.l.b16 %v150
    %v350 = vunpack.c.l.b16 %v151
    %v351 = vunpack.c.l.b16 %v152
    %v352 = vunpack.c.l.b16 %v153
    %v353 = vunpack.c.l.b16 %v154
    %v354 = vunpack.c.l.b16 %v155
    %v355 = vunpack.c.l.b16 %v156
    %v356 = vunpack.c.l.b16 %v157
    %v357 = vunpack.c.l.b16 %v158
    %v358 = vunpack.c.l.b16 %v159
    %v359 = vunpack.c.l.b16 %v160
    %v360 = vunpack.c.l.b16 %v161
    %v361 = vunpack.c.l.b16 %v162
    %v362 = vunpack.c.l.b16 %v163
    %v363 = vunpack.c.l.b16 %v164
    %v364 = vunpack.c.l.b16 %v165
    %v365 = vunpack.c.l.b16 %v166
    %v366 = vunpack.c.l.b16 %v167
    %v367 = vunpack.c.l.b16 %v168
    %v368 = vunpack.c.l.b16 %v169
    %v369 = vunpack.c.l.b16 %v170
    %v370 = vunpack.c.l.b16 %v171
    %v371 = vunpack.c.l.b16 %v172
    %v372 = vunpack.c.l.b16 %v173
    %v373 = vunpack.c.l.b16 %v174
    %v374 = vunpack.c.l.b16 %v175
    %v375 = vunpack.c.l.b16 %v176
    %v376 = vunpack.c.l.b16 %v177
    %v377 = vunpack.c.l.b16 %v178
    %v378 = vpack.c.b16 %v283, %v282
    %v379 = vpack.c.b16 %v285, %v284
    %v380 = vpack.c.b16 %v287, %v286
    %v381 = vpack.c.b16 %v289, %v288
    %v382 = vpack.c.b16 %v291, %v290
    %v383 = vpack.c.b16 %v293, %v292
    %v384 = vpack.c.b16 %v295, %v294
    %v385 = vpack.c.b16 %v297, %v296
    %v386 = vpack.c.b16 %v299, %v298
    %v387 = vpack.c.b16 %v301, %v300
    %v388 = vpack.c.b16 %v303, %v302
    %v389 = vpack.c.b16 %v305, %v304
    %v390 = vpack.c.b16 %v307, %v306
    %v391 = vpack.c.b16 %v309, %v308
    %v392 = vpack.c.b16 %v311, %v310
    %v393 = vpack.c.b16 %v313, %v312
    %v394 = vpack.c.b16 %v315, %v314
    %v395 = vpack.c.b16 %v317, %v316
    %v396 = vpack.c.b16 %v319, %v318
    %v397 = vpack.c.b16 %v321, %v320
    %v398 = vpack.c.b16 %v323, %v322
    %v399 = vpack.c.b16 %v325, %v324
    %v400 = vpack.c.b16 %v327, %v326
    %v401 = vpack.c.b16 %v329, %v328
    %v402 = vpack.c.b16 %v331, %v330
    %v403 = vpack.c.b16 %v333, %v332
    %v404 = vpack.c.b16 %v335, %v334
    %v405 = vpack.c.b16 %v337, %v336
    %v406 = vpack.c.b16 %v339, %v338
    %v407 = vpack.c.b16 %v341, %v340
    %v408 = vpack.c.b16 %v343, %v342
    %v409 = vpack.c.b16 %v345, %v344
    %v410 = vpack.c.b16 %v347, %v346
    %v411 = vpack.c.b16 %v349, %v348
    %v412 = vpack.c.b16 %v351, %v350
    %v413 = vpack.c.b16 %v353, %v352
    %v414 = vpack.c.b16 %v355, %v354
    %v415 = vpack.c.b16 %v357, %v356
    %v416 = vpack.c.b16 %v359, %v358
    %v417 = vpack.c.b16 %v361, %v360
    %v418 = vpack.c.b16 %v363, %v362
    %v419 = vpack.c.b16 %v365, %v364
    %v420 = vpack.c.b16 %v367, %v366
    %v421 = vpack.c.b16 %v369, %v368
    %v422 = vpack.c.b16 %v371, %v370
    %v423 = vpack.c.b16 %v373, %v372
    %v424 = vpack.c.b16 %v375, %v374
    %v425 = vpack.c.b16 %v377, %v376
    %474 = vmatprep.subr.bf16.mxu0 0
    %475 = vmatpush1.bf16.msra.mxu0 %v378
    %476 = vmatprep.subr.bf16.mxu0 0
    %477 = vmatpush1.bf16.msra.mxu0 %v379
    %478 = vmatprep.subr.bf16.mxu0 0
    %479 = vmatpush1.bf16.msra.mxu0 %v380
    %480 = vmatprep.subr.bf16.mxu0 0
    %481 = vmatpush1.bf16.msra.mxu0 %v381
    %482 = vmatprep.subr.bf16.mxu0 0
    %483 = vmatpush1.bf16.msra.mxu0 %v382
    %484 = vmatprep.subr.bf16.mxu0 0
    %485 = vmatpush1.bf16.msra.mxu0 %v383
    %486 = vmatprep.subr.bf16.mxu0 0
    %487 = vmatpush1.bf16.msra.mxu0 %v384
    %488 = vmatprep.subr.bf16.mxu0 0
    %489 = vmatpush1.bf16.msra.mxu0 %v385
    %490 = vmatprep.subr.bf16.mxu0 0
    %491 = vmatpush1.bf16.msra.mxu0 %v386
    %492 = vmatprep.subr.bf16.mxu0 0
    %493 = vmatpush1.bf16.msra.mxu0 %v387
    %494 = vmatprep.subr.bf16.mxu0 0
    %495 = vmatpush1.bf16.msra.mxu0 %v388
    %496 = vmatprep.subr.bf16.mxu0 0
    %497 = vmatpush1.bf16.msra.mxu0 %v389
    %498 = vmatprep.subr.bf16.mxu0 0
    %499 = vmatpush1.bf16.msra.mxu0 %v390
    %500 = vmatprep.subr.bf16.mxu0 0
    %501 = vmatpush1.bf16.msra.mxu0 %v391
    %502 = vmatprep.subr.bf16.mxu0 0
    %503 = vmatpush1.bf16.msra.mxu0 %v392
    %504 = vmatprep.subr.bf16.mxu0 0
    %505 = vmatpush1.bf16.msra.mxu0 %v393
    %506 = vmatprep.mubr.bf16.mxu0 %v78
    %507 = vmatmul.mubr.bf16.gmra.mrb[0].mxu0 %v77
    %v508 = vpop.f32.mrb[0].mxu0
    %v509 = vadd.f32 %v184, %v508
    %v510 = vpop.f32.mrb[0].mxu0
    %v511 = vpop.f32.mrb[0].mxu0
    %v512 = vpop.f32.mrb[0].mxu0
    %513 = vdwg.mxu0
    %514 = vmatprep.subr.bf16.mxu0 0
    %515 = vmatpush1.bf16.msra.mxu0 %v394
    %516 = vmatprep.subr.bf16.mxu0 0
    %517 = vmatpush1.bf16.msra.mxu0 %v395
    %518 = vmatprep.subr.bf16.mxu0 0
    %519 = vmatpush1.bf16.msra.mxu0 %v396
    %520 = vmatprep.subr.bf16.mxu0 0
    %521 = vmatpush1.bf16.msra.mxu0 %v397
    %522 = vmatprep.subr.bf16.mxu0 0
    %523 = vmatpush1.bf16.msra.mxu0 %v398
    %524 = vmatprep.subr.bf16.mxu0 0
    %525 = vmatpush1.bf16.msra.mxu0 %v399
    %526 = vmatprep.subr.bf16.mxu0 0
    %527 = vmatpush1.bf16.msra.mxu0 %v400
    %528 = vmatprep.subr.bf16.mxu0 0
    %529 = vmatpush1.bf16.msra.mxu0 %v401
    %530 = vmatprep.subr.bf16.mxu0 0
    %531 = vmatpush1.bf16.msra.mxu0 %v402
    %532 = vmatprep.subr.bf16.mxu0 0
    %533 = vmatpush1.bf16.msra.mxu0 %v403
    %534 = vmatprep.subr.bf16.mxu0 0
    %535 = vmatpush1.bf16.msra.mxu0 %v404
    %536 = vmatprep.subr.bf16.mxu0 0
    %537 = vmatpush1.bf16.msra.mxu0 %v405
    %538 = vmatprep.subr.bf16.mxu0 0
    %539 = vmatpush1.bf16.msra.mxu0 %v406
    %540 = vmatprep.subr.bf16.mxu0 0
    %541 = vmatpush1.bf16.msra.mxu0 %v407
    %542 = vmatprep.subr.bf16.mxu0 0
    %543 = vmatpush1.bf16.msra.mxu0 %v408
    %544 = vmatprep.subr.bf16.mxu0 0
    %545 = vmatpush1.bf16.msra.mxu0 %v409
    %546 = vmatprep.mubr.bf16.mxu0 %v80
    %547 = vmatmul.mubr.bf16.gmra.mrb[0].mxu0 %v79
    %v548 = vpop.f32.mrb[0].mxu0
    %v549 = vadd.f32 %v509, %v548
    %v550 = vpop.f32.mrb[0].mxu0
    %v551 = vpop.f32.mrb[0].mxu0
    %v552 = vpop.f32.mrb[0].mxu0
    %553 = vdwg.mxu0
    %554 = vmatprep.subr.bf16.mxu0 0
    %555 = vmatpush1.bf16.msra.mxu0 %v410
    %556 = vmatprep.subr.bf16.mxu0 0
    %557 = vmatpush1.bf16.msra.mxu0 %v411
    %558 = vmatprep.subr.bf16.mxu0 0
    %559 = vmatpush1.bf16.msra.mxu0 %v412
    %560 = vmatprep.subr.bf16.mxu0 0
    %561 = vmatpush1.bf16.msra.mxu0 %v413
    %562 = vmatprep.subr.bf16.mxu0 0
    %563 = vmatpush1.bf16.msra.mxu0 %v414
    %564 = vmatprep.subr.bf16.mxu0 0
    %565 = vmatpush1.bf16.msra.mxu0 %v415
    %566 = vmatprep.subr.bf16.mxu0 0
    %567 = vmatpush1.bf16.msra.mxu0 %v416
    %568 = vmatprep.subr.bf16.mxu0 0
    %569 = vmatpush1.bf16.msra.mxu0 %v417
    %570 = vmatprep.subr.bf16.mxu0 0
    %571 = vmatpush1.bf16.msra.mxu0 %v418
    %572 = vmatprep.subr.bf16.mxu0 0
    %573 = vmatpush1.bf16.msra.mxu0 %v419
    %574 = vmatprep.subr.bf16.mxu0 0
    %575 = vmatpush1.bf16.msra.mxu0 %v420
    %576 = vmatprep.subr.bf16.mxu0 0
    %577 = vmatpush1.bf16.msra.mxu0 %v421
    %578 = vmatprep.subr.bf16.mxu0 0
    %579 = vmatpush1.bf16.msra.mxu0 %v422
    %580 = vmatprep.subr.bf16.mxu0 0
    %581 = vmatpush1.bf16.msra.mxu0 %v423
    %582 = vmatprep.subr.bf16.mxu0 0
    %583 = vmatpush1.bf16.msra.mxu0 %v424
    %584 = vmatprep.subr.bf16.mxu0 0
    %585 = vmatpush1.bf16.msra.mxu0 %v425
    %586 = vmatprep.mubr.bf16.mxu0 %v82
    %587 = vmatmul.mubr.bf16.gmra.mrb[0].mxu0 %v81
    %v588 = vpop.f32.mrb[0].mxu0
    %v589 = vadd.f32 %v549, %v588
    %v590 = vpop.f32.mrb[0].mxu0
    %v591 = vpop.f32.mrb[0].mxu0
    %v592 = vpop.f32.mrb[0].mxu0
    %593 = vdwg.mxu0
    %v594 = vmul.f32 %v589, 0.5
    %v595 = vmul.f32 %v589, 0.70710677
    %v596 = verf.f32.pop %v595
    %v597 = vadd.f32 %v596, 1.0
    %v598 = vmul.f32 %v594, %v597
    %599 = vst [vmem:[#allocation7] sm:$0x3] %v598
    // Predicated region
    $region22: #{tpu_custom_call.1} parent=1 // pred_check
      _
    $region23: #{tpu_custom_call.1} parent=1 // pred_check_branch
      %601 = sbr.rel (0) target = $region25
    $region24: #{tpu_custom_call.1} parent=1 // pred_region
      %s603 = ssub.s32 32, 32
      %604 = vsyncadd [#allocation4], %s603
      %s606 = sshll.u32 [#allocation7], 4
      %s607 = int_to_ptr.vmem [resolvable:$true] %s606
      %609 = dma.vmem_to_hbm [thread:$0]  %s607, 32, %s3, [#allocation4]
    $region25: #{tpu_custom_call.1} parent=1 // pred_fallthru
      _
    // Predicated region
    $region26: #{tpu_custom_call.1} parent=1 // pred_check
      _
    $region27: #{tpu_custom_call.1} parent=1 // pred_check_branch
      %611 = sbr.rel (0) target = $region29
    $region28: #{tpu_custom_call.1} parent=1 // pred_region
      %612 = dma.done [#allocation4], 32
    $region29: #{tpu_custom_call.1} parent=1 // pred_fallthru
      _
    %613 = vsyncpa [#allocation3], 1
    %614 = vsyncpa [#allocation6], 1
    %615 = vsyncpa [#allocation4], 1

</llo_original>
